<compile_context>
chip_gen: v7x
topology: tpu7x:2x2x1
jax: 0.10.0
libtpu: 0.0.40
codegen_flags: <defaults>
</compile_context>

<pallas_src>
import math

import numpy as np
import jax
import jax.numpy as jnp
from jax.experimental import pallas as pl
from jax.experimental.pallas import tpu as pltpu

# ---- hyperparameters implied by the module -------------------------------
OBS_SLICES = [(0, 4), (4, 11), (11, 18), (18, 22), (22, 26)]
OBS_DIM = 26
N_TOK = len(OBS_SLICES)            # 5 observation tokens
S_TOK = N_TOK + 1                  # + cls token = 6 tokens
FEATURES = 32                      # args.actor_features_num
HEADS = 4                          # args.head_num
HEAD_DIM = FEATURES // HEADS
N_ACT = 5                          # linear_head output size


def _round_up(x, m):
    return (x + m - 1) // m * m


# --------------------------- the kernel ------------------------------------
def _actor_attention_kernel(obs_ref, u_ref,
                            wenc_ref, benc_ref,
                            ws_ref, bs_ref, wones_ref, wp_ref,
                            wvb_ref, bvb_ref, rw_ref, bout_ref,
                            policy_ref):
    # 1) fused block-diagonal segment encoders + ReLU                 (Bt, 160)
    feat = jnp.dot(obs_ref[...], wenc_ref[...],
                   preferred_element_type=jnp.float32) + benc_ref[...]
    feat = jnp.maximum(feat, 0.0)

    # 2) attention scores of the (constant) cls query against all 6 tokens,
    #    all heads, pre-scaled by 1/sqrt(dh).  Column c = h*6 + t; t = 0 is the
    #    cls token (its constant score lives in the bias only).
    s = jnp.dot(feat, ws_ref[...],
                preferred_element_type=jnp.float32) + bs_ref[...]     # (Bt, 24)

    # 3) per-head softmax over 6 tokens, vectorized over all 4 heads at once.
    #    Subtracting the global row max is exact per head (shift invariance);
    #    per-head sums are broadcast to every lane of the head block with one
    #    block-diagonal 0/1 matmul (MXU), division goes to the EUP.
    m = jnp.max(s, axis=-1, keepdims=True)
    e = jnp.exp(s - m)
    den = jnp.dot(e, wones_ref[...],
                  preferred_element_type=jnp.float32)                 # (Bt, 24)
    den = jnp.maximum(den, 1e-30)        # guard: no NaN even on full underflow
    p = e * pl.reciprocal(den, approx=True)

    # 4) scatter attention weights to the per-lane (token, head-dim) layout
    #    with a 0/1 matmul, compute V for all tokens, weight elementwise.
    p_exp = jnp.dot(p, wp_ref[...],
                    preferred_element_type=jnp.float32)               # (Bt, 192)
    vblk = jnp.dot(feat, wvb_ref[...],
                   preferred_element_type=jnp.float32) + bvb_ref[...]  # (Bt, 192)

    # 5) logits = attn_out(cls) @ (wo @ wh) + (bo @ wh + bh); the token
    #    reduction and both output projections are folded into rw / bout.
    logits = jnp.dot(p_exp * vblk, rw_ref[...],
                     preferred_element_type=jnp.float32) + bout_ref[...]  # (Bt, 5)

    # 6) Gumbel-softmax sampling: softmax(logits - log(-log(u)))
    z = logits - jnp.log(-jnp.log(u_ref[...]))
    z = z - jnp.max(z, axis=-1, keepdims=True)
    e2 = jnp.exp(z)
    policy_ref[...] = e2 * pl.reciprocal(jnp.sum(e2, axis=-1, keepdims=True),
                                         approx=True)


# ---------------------- wrapper (grid + BlockSpecs) -------------------------
def actor_attention_forward(obs, u, folded, *, block_b=1024):
    """obs: (B, 26) f32, u: (B, 5) uniform noise in (0,1).  Returns (B, 5)."""
    B = obs.shape[0]
    bt = min(block_b, _round_up(max(B, 1), 8))
    b_pad = _round_up(B, bt)
    if b_pad != B:
        obs = jnp.pad(obs, ((0, b_pad - B), (0, 0)))
        # pad u with 0.5 so -log(-log(u)) is finite on (discarded) pad rows.
        u = jnp.pad(u, ((0, b_pad - B), (0, 0)), constant_values=0.5)

    row = lambda i: (i, 0)         # batch-tiled arrays
    resident = lambda i: (0, 0)    # weights stay VMEM-resident across steps

    weights = (folded["wenc"], folded["benc"], folded["ws"], folded["bs"],
               folded["wones"], folded["wp"], folded["wvb"], folded["bvb"],
               folded["rw"], folded["bout"])
    in_specs = ([pl.BlockSpec((bt, OBS_DIM), row),
                 pl.BlockSpec((bt, N_ACT), row)]
                + [pl.BlockSpec(w.shape, resident) for w in weights])

    out = pl.pallas_call(
        _actor_attention_kernel,
        out_shape=jax.ShapeDtypeStruct((b_pad, N_ACT), jnp.float32),
        grid=(b_pad // bt,),
        in_specs=in_specs,
        out_specs=pl.BlockSpec((bt, N_ACT), row),
        compiler_params=pltpu.CompilerParams(
            dimension_semantics=("parallel",)),
    )(obs, u, *weights)
    return out[:B]


# -------- batch-independent weight folding (pure constant algebra) ----------
def fold_params(p):
    """Fold all batch-independent attention algebra into constant matrices.

    Only weights are combined here (like BN-folding); every per-sample op
    still runs inside the kernel.
    """
    inv = 1.0 / math.sqrt(HEAD_DIM)
    cls = p["cls"]
    wk, bk, wv, bv = p["wk"], p["bk"], p["wv"], p["bv"]

    q_cls = cls @ p["wq"] + p["bq"]          # (1, F) constant cls query
    k_cls = cls @ wk + bk                    # (1, F)
    v_cls = cls @ wv + bv                    # (1, F)
    woh = p["wo"] @ p["wh"]                  # (F, 5)  wo -> linear head
    bout = p["bo"] @ p["wh"] + p["bh"]       # (1, 5)

    ws = jnp.zeros((N_TOK * FEATURES, HEADS * S_TOK), jnp.float32)
    bs = jnp.zeros((1, HEADS * S_TOK), jnp.float32)
    wvb = jnp.zeros((N_TOK * FEATURES, S_TOK * FEATURES), jnp.float32)
    bvb = jnp.zeros((1, S_TOK * FEATURES), jnp.float32)
    rw = jnp.zeros((S_TOK * FEATURES, N_ACT), jnp.float32)

    for h in range(HEADS):
        hs = slice(h * HEAD_DIM, (h + 1) * HEAD_DIM)
        # cls-token score (batch independent): bias only, zero weight column.
        bs = bs.at[0, h * S_TOK].set(inv * jnp.sum(q_cls[0, hs] * k_cls[0, hs]))
        col_w = inv * (wk[:, hs] @ q_cls[0, hs])            # (F,)
        col_b = inv * jnp.sum(bk[0, hs] * q_cls[0, hs])
        for i in range(N_TOK):
            c = h * S_TOK + 1 + i
            ws = ws.at[i * FEATURES:(i + 1) * FEATURES, c].set(col_w)
            bs = bs.at[0, c].set(col_b)

    # block-diagonal ones: per-head denominator broadcast for the softmax.
    wones = jnp.asarray(
        np.kron(np.eye(HEADS, dtype=np.float32),
                np.ones((S_TOK, S_TOK), dtype=np.float32)))          # (24, 24)

    # 0/1 scatter: attention weight (head h, token t) -> the HEAD_DIM lanes of
    # head h inside token t's 32-lane group (lets the MXU do the broadcast).
    wp_np = np.zeros((HEADS * S_TOK, S_TOK * FEATURES), np.float32)
    for h in range(HEADS):
        for t in range(S_TOK):
            c0 = t * FEATURES + h * HEAD_DIM
            wp_np[h * S_TOK + t, c0:c0 + HEAD_DIM] = 1.0
    wp = jnp.asarray(wp_np)

    # V for all 6 tokens, token-major on 192 lanes (cls token is constant).
    bvb = bvb.at[0, 0:FEATURES].set(v_cls[0])
    for i in range(N_TOK):
        wvb = wvb.at[i * FEATURES:(i + 1) * FEATURES,
                     (1 + i) * FEATURES:(2 + i) * FEATURES].set(wv)
        bvb = bvb.at[0, (1 + i) * FEATURES:(2 + i) * FEATURES].set(bv[0])

    # token reduction + output projection + linear head, all folded.
    for t in range(S_TOK):
        rw = rw.at[t * FEATURES:(t + 1) * FEATURES, :].set(woh)

    return dict(wenc=p["wenc"], benc=p["benc"], ws=ws, bs=bs, wones=wones,
                wp=wp, wvb=wvb, bvb=bvb, rw=rw, bout=bout)


# ---- deterministic parameter initialization (synthetic, no checkpoint) ----
def init_params(key):
    ks = jax.random.split(key, 24)
    wenc = jnp.zeros((OBS_DIM, N_TOK * FEATURES), jnp.float32)
    benc_parts = []
    for i, (s, e) in enumerate(OBS_SLICES):
        w = 0.2 * jax.random.normal(ks[i], (e - s, FEATURES), jnp.float32)
        wenc = wenc.at[s:e, i * FEATURES:(i + 1) * FEATURES].set(w)
        benc_parts.append(0.05 * jax.random.normal(ks[5 + i], (FEATURES,), jnp.float32))
    benc = jnp.concatenate(benc_parts).reshape(1, N_TOK * FEATURES)

    cls = jax.random.normal(ks[10], (1, FEATURES), jnp.float32)

    def lin(k, din, dout):
        k1, k2 = jax.random.split(k)
        return (0.2 * jax.random.normal(k1, (din, dout), jnp.float32),
                0.05 * jax.random.normal(k2, (1, dout), jnp.float32))

    wq, bq = lin(ks[11], FEATURES, FEATURES)
    wk, bk = lin(ks[12], FEATURES, FEATURES)
    wv, bv = lin(ks[13], FEATURES, FEATURES)
    wo, bo = lin(ks[14], FEATURES, FEATURES)
    wh, bh = lin(ks[15], FEATURES, N_ACT)
    return dict(wenc=wenc, benc=benc, cls=cls,
                wq=wq, bq=bq, wk=wk, bk=bk, wv=wv, bv=bv,
                wo=wo, bo=bo, wh=wh, bh=bh)


# ---- pure-JAX reference (unfused, same math) for a sanity check ------------
def reference_forward(obs, u, p):
    feat = jnp.maximum(obs @ p["wenc"] + p["benc"], 0.0)             # (B, 5F)
    f = feat.reshape(-1, N_TOK, FEATURES)
    cls = jnp.broadcast_to(p["cls"][None, :, :], (f.shape[0], 1, FEATURES))
    toks = jnp.concatenate([cls, f], axis=1)                         # (B, 6, F)
    q = toks @ p["wq"] + p["bq"]
    k = toks @ p["wk"] + p["bk"]
    v = toks @ p["wv"] + p["bv"]
    B, S, _ = q.shape
    qh = q.reshape(B, S, HEADS, HEAD_DIM).transpose(0, 2, 1, 3)
    kh = k.reshape(B, S, HEADS, HEAD_DIM).transpose(0, 2, 1, 3)
    vh = v.reshape(B, S, HEADS, HEAD_DIM).transpose(0, 2, 1, 3)
    s = jnp.einsum("bhqd,bhkd->bhqk", qh, kh) / math.sqrt(HEAD_DIM)
    a = jax.nn.softmax(s, axis=-1)
    o = jnp.einsum("bhqk,bhkd->bhqd", a, vh).transpose(0, 2, 1, 3).reshape(B, S, FEATURES)
    y = o @ p["wo"] + p["bo"]
    logits = y[:, 0] @ p["wh"] + p["bh"]
    return jax.nn.softmax(logits - jnp.log(-jnp.log(u)), axis=-1)


if __name__ == "__main__":
    key = jax.random.PRNGKey(0)
    kp, kx, ku, kx2, ku2 = jax.random.split(key, 5)

    params = init_params(kp)
    folded = fold_params(params)

    # Small, module-sized batch.
    B = 2
    obs = jax.random.normal(kx, (B, OBS_DIM), jnp.float32)
    u = jax.random.uniform(ku, (B, N_ACT), jnp.float32, minval=1e-6, maxval=1.0)
    policy = jax.block_until_ready(actor_attention_forward(obs, u, folded))
    ref = reference_forward(obs, u, params)
    assert policy.shape == (B, N_ACT)
    assert bool(jnp.all(jnp.isfinite(policy)))
    # tolerance accounts for EUP approximate-reciprocal softmax denominators
    assert bool(jnp.allclose(policy, ref, rtol=2e-2, atol=2e-3)), (policy, ref)

    # Larger batch (not a multiple of the block): exercises grid + padding.
    B2 = 2500
    obs2 = jax.random.normal(kx2, (B2, OBS_DIM), jnp.float32)
    u2 = jax.random.uniform(ku2, (B2, N_ACT), jnp.float32, minval=1e-6, maxval=1.0)
    policy2 = jax.block_until_ready(actor_attention_forward(obs2, u2, folded))
    ref2 = reference_forward(obs2, u2, params)
    assert policy2.shape == (B2, N_ACT)
    assert bool(jnp.all(jnp.isfinite(policy2)))
    assert bool(jnp.allclose(policy2, ref2, rtol=2e-2, atol=2e-3))

    print("KERNEL_OK")
</pallas_src>

<mosaic_0001>
module attributes {stable_mosaic.version = 11 : i64} {
  func.func @_actor_attention_kernel(%arg0: i32, %arg1: memref<8x26xf32, #tpu.memory_space<vmem>>, %arg2: memref<8x5xf32, #tpu.memory_space<vmem>>, %arg3: memref<26x160xf32, #tpu.memory_space<vmem>>, %arg4: memref<1x160xf32, #tpu.memory_space<vmem>>, %arg5: memref<160x24xf32, #tpu.memory_space<vmem>>, %arg6: memref<1x24xf32, #tpu.memory_space<vmem>>, %arg7: memref<24x24xf32, #tpu.memory_space<vmem>>, %arg8: memref<24x192xf32, #tpu.memory_space<vmem>>, %arg9: memref<160x192xf32, #tpu.memory_space<vmem>>, %arg10: memref<1x192xf32, #tpu.memory_space<vmem>>, %arg11: memref<192x5xf32, #tpu.memory_space<vmem>>, %arg12: memref<1x5xf32, #tpu.memory_space<vmem>>, %arg13: memref<8x5xf32, #tpu.memory_space<vmem>>) attributes {dimension_semantics = [#tpu.dimension_semantics<parallel>], iteration_bounds = array<i64: 1>, scalar_prefetch = 0 : i64, scratch_operands = 0 : i64, tpu.core_type = #tpu.core_type<tc>, window_params = [{transform_indices = @transform_0, window_bounds = array<i64: 8, 26>}, {transform_indices = @transform_1, window_bounds = array<i64: 8, 5>}, {pipeline_mode = #tpu.pipeline_mode<synchronous>, transform_indices = @transform_2, window_bounds = array<i64: 26, 160>}, {pipeline_mode = #tpu.pipeline_mode<synchronous>, transform_indices = @transform_3, window_bounds = array<i64: 1, 160>}, {pipeline_mode = #tpu.pipeline_mode<synchronous>, transform_indices = @transform_4, window_bounds = array<i64: 160, 24>}, {pipeline_mode = #tpu.pipeline_mode<synchronous>, transform_indices = @transform_5, window_bounds = array<i64: 1, 24>}, {pipeline_mode = #tpu.pipeline_mode<synchronous>, transform_indices = @transform_6, window_bounds = array<i64: 24, 24>}, {pipeline_mode = #tpu.pipeline_mode<synchronous>, transform_indices = @transform_7, window_bounds = array<i64: 24, 192>}, {pipeline_mode = #tpu.pipeline_mode<synchronous>, transform_indices = @transform_8, window_bounds = array<i64: 160, 192>}, {pipeline_mode = #tpu.pipeline_mode<synchronous>, transform_indices = @transform_9, window_bounds = array<i64: 1, 192>}, {pipeline_mode = #tpu.pipeline_mode<synchronous>, transform_indices = @transform_10, window_bounds = array<i64: 192, 5>}, {pipeline_mode = #tpu.pipeline_mode<synchronous>, transform_indices = @transform_11, window_bounds = array<i64: 1, 5>}, {transform_indices = @transform_12, window_bounds = array<i64: 8, 5>}]} {
    %c0 = arith.constant 0 : index
    %c0_0 = arith.constant 0 : index
    %0 = vector.load %arg1[%c0, %c0_0] : memref<8x26xf32, #tpu.memory_space<vmem>>, vector<8x26xf32>
    %c0_1 = arith.constant 0 : index
    %c0_2 = arith.constant 0 : index
    %1 = vector.load %arg3[%c0_1, %c0_2] : memref<26x160xf32, #tpu.memory_space<vmem>>, vector<26x160xf32>
    %cst = arith.constant dense<0.000000e+00> : vector<8x160xf32>
    %2 = tpu.matmul %0, %1, %cst {dimension_numbers = #tpu.dot_dimension_numbers<[1], [0], [0], [1], [0, 0, 1, 1], [], []>} : vector<8x26xf32>, vector<26x160xf32>, vector<8x160xf32> -> vector<8x160xf32>
    %c0_3 = arith.constant 0 : index
    %c0_4 = arith.constant 0 : index
    %3 = vector.load %arg4[%c0_3, %c0_4] : memref<1x160xf32, #tpu.memory_space<vmem>>, vector<1x160xf32>
    %4 = vector.broadcast %3 : vector<1x160xf32> to vector<8x160xf32>
    %5 = arith.addf %2, %4 : vector<8x160xf32>
    %cst_5 = arith.constant 0.000000e+00 : f32
    %6 = vector.broadcast %cst_5 : f32 to vector<8x160xf32>
    %7 = arith.maximumf %5, %6 : vector<8x160xf32>
    %c0_6 = arith.constant 0 : index
    %c0_7 = arith.constant 0 : index
    %8 = vector.load %arg5[%c0_6, %c0_7] : memref<160x24xf32, #tpu.memory_space<vmem>>, vector<160x24xf32>
    %cst_8 = arith.constant dense<0.000000e+00> : vector<8x24xf32>
    %9 = tpu.matmul %7, %8, %cst_8 {dimension_numbers = #tpu.dot_dimension_numbers<[1], [0], [0], [1], [0, 0, 1, 1], [], []>} : vector<8x160xf32>, vector<160x24xf32>, vector<8x24xf32> -> vector<8x24xf32>
    %c0_9 = arith.constant 0 : index
    %c0_10 = arith.constant 0 : index
    %10 = vector.load %arg6[%c0_9, %c0_10] : memref<1x24xf32, #tpu.memory_space<vmem>>, vector<1x24xf32>
    %11 = vector.broadcast %10 : vector<1x24xf32> to vector<8x24xf32>
    %12 = arith.addf %9, %11 : vector<8x24xf32>
    %cst_11 = arith.constant dense<0xFF800000> : vector<8xf32>
    %13 = vector.multi_reduction <maximumf>, %12, %cst_11 [1] : vector<8x24xf32> to vector<8xf32>
    %14 = vector.shape_cast %13 : vector<8xf32> to vector<8x1xf32>
    %15 = vector.broadcast %14 : vector<8x1xf32> to vector<8x24xf32>
    %16 = arith.subf %12, %15 : vector<8x24xf32>
    %17 = math.exp %16 : vector<8x24xf32>
    %c0_12 = arith.constant 0 : index
    %c0_13 = arith.constant 0 : index
    %18 = vector.load %arg7[%c0_12, %c0_13] : memref<24x24xf32, #tpu.memory_space<vmem>>, vector<24x24xf32>
    %cst_14 = arith.constant dense<0.000000e+00> : vector<8x24xf32>
    %19 = tpu.matmul %17, %18, %cst_14 {dimension_numbers = #tpu.dot_dimension_numbers<[1], [0], [0], [1], [0, 0, 1, 1], [], []>} : vector<8x24xf32>, vector<24x24xf32>, vector<8x24xf32> -> vector<8x24xf32>
    %cst_15 = arith.constant 1.000000e-30 : f32
    %20 = vector.broadcast %cst_15 : f32 to vector<8x24xf32>
    %21 = arith.maximumf %19, %20 : vector<8x24xf32>
    %22 = tpu.reciprocal %21 {approx = true} : vector<8x24xf32> -> vector<8x24xf32>
    %23 = arith.mulf %17, %22 : vector<8x24xf32>
    %c0_16 = arith.constant 0 : index
    %c0_17 = arith.constant 0 : index
    %24 = vector.load %arg8[%c0_16, %c0_17] : memref<24x192xf32, #tpu.memory_space<vmem>>, vector<24x192xf32>
    %cst_18 = arith.constant dense<0.000000e+00> : vector<8x192xf32>
    %25 = tpu.matmul %23, %24, %cst_18 {dimension_numbers = #tpu.dot_dimension_numbers<[1], [0], [0], [1], [0, 0, 1, 1], [], []>} : vector<8x24xf32>, vector<24x192xf32>, vector<8x192xf32> -> vector<8x192xf32>
    %c0_19 = arith.constant 0 : index
    %c0_20 = arith.constant 0 : index
    %26 = vector.load %arg9[%c0_19, %c0_20] : memref<160x192xf32, #tpu.memory_space<vmem>>, vector<160x192xf32>
    %cst_21 = arith.constant dense<0.000000e+00> : vector<8x192xf32>
    %27 = tpu.matmul %7, %26, %cst_21 {dimension_numbers = #tpu.dot_dimension_numbers<[1], [0], [0], [1], [0, 0, 1, 1], [], []>} : vector<8x160xf32>, vector<160x192xf32>, vector<8x192xf32> -> vector<8x192xf32>
    %c0_22 = arith.constant 0 : index
    %c0_23 = arith.constant 0 : index
    %28 = vector.load %arg10[%c0_22, %c0_23] : memref<1x192xf32, #tpu.memory_space<vmem>>, vector<1x192xf32>
    %29 = vector.broadcast %28 : vector<1x192xf32> to vector<8x192xf32>
    %30 = arith.addf %27, %29 : vector<8x192xf32>
    %31 = arith.mulf %25, %30 : vector<8x192xf32>
    %c0_24 = arith.constant 0 : index
    %c0_25 = arith.constant 0 : index
    %32 = vector.load %arg11[%c0_24, %c0_25] : memref<192x5xf32, #tpu.memory_space<vmem>>, vector<192x5xf32>
    %cst_26 = arith.constant dense<0.000000e+00> : vector<8x5xf32>
    %33 = tpu.matmul %31, %32, %cst_26 {dimension_numbers = #tpu.dot_dimension_numbers<[1], [0], [0], [1], [0, 0, 1, 1], [], []>} : vector<8x192xf32>, vector<192x5xf32>, vector<8x5xf32> -> vector<8x5xf32>
    %c0_27 = arith.constant 0 : index
    %c0_28 = arith.constant 0 : index
    %34 = vector.load %arg12[%c0_27, %c0_28] : memref<1x5xf32, #tpu.memory_space<vmem>>, vector<1x5xf32>
    %35 = vector.broadcast %34 : vector<1x5xf32> to vector<8x5xf32>
    %36 = arith.addf %33, %35 : vector<8x5xf32>
    %c0_29 = arith.constant 0 : index
    %c0_30 = arith.constant 0 : index
    %37 = vector.load %arg2[%c0_29, %c0_30] : memref<8x5xf32, #tpu.memory_space<vmem>>, vector<8x5xf32>
    %38 = math.log %37 : vector<8x5xf32>
    %cst_31 = arith.constant 0.000000e+00 : f32
    %39 = vector.broadcast %cst_31 : f32 to vector<8x5xf32>
    %40 = arith.subf %39, %38 : vector<8x5xf32>
    %41 = math.log %40 : vector<8x5xf32>
    %42 = arith.subf %36, %41 : vector<8x5xf32>
    %cst_32 = arith.constant dense<0xFF800000> : vector<8xf32>
    %43 = vector.multi_reduction <maximumf>, %42, %cst_32 [1] : vector<8x5xf32> to vector<8xf32>
    %44 = vector.shape_cast %43 : vector<8xf32> to vector<8x1xf32>
    %45 = vector.broadcast %44 : vector<8x1xf32> to vector<8x5xf32>
    %46 = arith.subf %42, %45 : vector<8x5xf32>
    %47 = math.exp %46 : vector<8x5xf32>
    %cst_33 = arith.constant dense<0.000000e+00> : vector<8xf32>
    %48 = vector.multi_reduction <add>, %47, %cst_33 [1] : vector<8x5xf32> to vector<8xf32>
    %49 = vector.shape_cast %48 : vector<8xf32> to vector<8x1xf32>
    %50 = tpu.reciprocal %49 {approx = true} : vector<8x1xf32> -> vector<8x1xf32>
    %51 = vector.broadcast %50 : vector<8x1xf32> to vector<8x5xf32>
    %52 = arith.mulf %47, %51 : vector<8x5xf32>
    %c0_34 = arith.constant 0 : index
    %c0_35 = arith.constant 0 : index
    %53 = vector.load %arg13[%c0_34, %c0_35] : memref<8x5xf32, #tpu.memory_space<vmem>>, vector<8x5xf32>
    tpu.vector_store %arg13[%c0_34, %c0_35], %52 {strides = array<i32>} : memref<8x5xf32, #tpu.memory_space<vmem>>, vector<8x5xf32>,
    return
  }
  func.func @transform_0(%arg0: i32) -> (i32, i32) {
    %c0_i32 = arith.constant 0 : i32
    %c0_i32_0 = arith.constant 0 : i32
    return %arg0, %c0_i32 : i32, i32
  }
  func.func @transform_1(%arg0: i32) -> (i32, i32) {
    %c0_i32 = arith.constant 0 : i32
    %c0_i32_0 = arith.constant 0 : i32
    return %arg0, %c0_i32 : i32, i32
  }
  func.func @transform_2(%arg0: i32) -> (i32, i32) {
    %c0_i32 = arith.constant 0 : i32
    %c0_i32_0 = arith.constant 0 : i32
    %c0_i32_1 = arith.constant 0 : i32
    return %c0_i32, %c0_i32_0 : i32, i32
  }
  func.func @transform_3(%arg0: i32) -> (i32, i32) {
    %c0_i32 = arith.constant 0 : i32
    %c0_i32_0 = arith.constant 0 : i32
    %c0_i32_1 = arith.constant 0 : i32
    return %c0_i32, %c0_i32_0 : i32, i32
  }
  func.func @transform_4(%arg0: i32) -> (i32, i32) {
    %c0_i32 = arith.constant 0 : i32
    %c0_i32_0 = arith.constant 0 : i32
    %c0_i32_1 = arith.constant 0 : i32
    return %c0_i32, %c0_i32_0 : i32, i32
  }
  func.func @transform_5(%arg0: i32) -> (i32, i32) {
    %c0_i32 = arith.constant 0 : i32
    %c0_i32_0 = arith.constant 0 : i32
    %c0_i32_1 = arith.constant 0 : i32
    return %c0_i32, %c0_i32_0 : i32, i32
  }
  func.func @transform_6(%arg0: i32) -> (i32, i32) {
    %c0_i32 = arith.constant 0 : i32
    %c0_i32_0 = arith.constant 0 : i32
    %c0_i32_1 = arith.constant 0 : i32
    return %c0_i32, %c0_i32_0 : i32, i32
  }
  func.func @transform_7(%arg0: i32) -> (i32, i32) {
    %c0_i32 = arith.constant 0 : i32
    %c0_i32_0 = arith.constant 0 : i32
    %c0_i32_1 = arith.constant 0 : i32
    return %c0_i32, %c0_i32_0 : i32, i32
  }
  func.func @transform_8(%arg0: i32) -> (i32, i32) {
    %c0_i32 = arith.constant 0 : i32
    %c0_i32_0 = arith.constant 0 : i32
    %c0_i32_1 = arith.constant 0 : i32
    return %c0_i32, %c0_i32_0 : i32, i32
  }
  func.func @transform_9(%arg0: i32) -> (i32, i32) {
    %c0_i32 = arith.constant 0 : i32
    %c0_i32_0 = arith.constant 0 : i32
    %c0_i32_1 = arith.constant 0 : i32
    return %c0_i32, %c0_i32_0 : i32, i32
  }
  func.func @transform_10(%arg0: i32) -> (i32, i32) {
    %c0_i32 = arith.constant 0 : i32
    %c0_i32_0 = arith.constant 0 : i32
    %c0_i32_1 = arith.constant 0 : i32
    return %c0_i32, %c0_i32_0 : i32, i32
  }
  func.func @transform_11(%arg0: i32) -> (i32, i32) {
    %c0_i32 = arith.constant 0 : i32
    %c0_i32_0 = arith.constant 0 : i32
    %c0_i32_1 = arith.constant 0 : i32
    return %c0_i32, %c0_i32_0 : i32, i32
  }
  func.func @transform_12(%arg0: i32) -> (i32, i32) {
    %c0_i32 = arith.constant 0 : i32
    %c0_i32_0 = arith.constant 0 : i32
    return %arg0, %c0_i32 : i32, i32
  }
}

</mosaic_0001>

<llo_original>
// kernel: tpu_custom_call.1
$region0: #{tpu_custom_call.1}
  #allocation0 [shape = 'u32[]', space=smem, size = 0x4, offset = 0x4, fixed_abs, tag = 'smem constant byte address 0x4 - core index']
  #allocation1 [shape = 'u32[144,128]{1,0:T(1,128)}', space=vmem, size = 0x12000, scoped, tag = 'internal scratch']
  %s0 = inlined_call_operand.hbm [shape: f32[8,26], index: 0, kind: input, shape index: {}]
  %s1 = inlined_call_operand.hbm [shape: f32[8,5], index: 1, kind: input, shape index: {}]
  %s2 = inlined_call_operand.vmem [shape: f32[26,160], index: 2, kind: input, shape index: {}]
  %s3 = inlined_call_operand.vmem [shape: f32[1,160], index: 3, kind: input, shape index: {}]
  %s4 = inlined_call_operand.vmem [shape: f32[160,24], index: 4, kind: input, shape index: {}]
  %s5 = inlined_call_operand.hbm [shape: f32[1,24], index: 5, kind: input, shape index: {}]
  %s6 = inlined_call_operand.hbm [shape: f32[24,24], index: 6, kind: input, shape index: {}]
  %s7 = inlined_call_operand.vmem [shape: f32[24,192], index: 7, kind: input, shape index: {}]
  %s8 = inlined_call_operand.vmem [shape: f32[160,192], index: 8, kind: input, shape index: {}]
  %s9 = inlined_call_operand.hbm [shape: f32[1,192], index: 9, kind: input, shape index: {}]
  %s10 = inlined_call_operand.vmem [shape: f32[192,5], index: 10, kind: input, shape index: {}]
  %s11 = inlined_call_operand.vmem [shape: f32[1,5], index: 11, kind: input, shape index: {}]
  %s12 = inlined_call_operand.hbm [shape: f32[8,5], index: 12, kind: output, shape index: {}]
  %s13 = sld [smem:[#allocation0]]
  $region78: #{tpu_custom_call.1} parent=0
    _
  %s15 = ssub.s32 1, %s13
  %s16 = scalar_select 0, %s15, %s13
  $region1: #{tpu_custom_call.1} parent=0
    #allocation2 [shape = 'u8[4096]{0}', space=vmem, size = 0x1000, scoped, tag = 'input window, operand 0, single buffered']
    #allocation3 [shape = 's32[1]{0}', space=sflag, size = 0x4, scoped, tag = 'scoped memory for tpu_custom_call.1']
    #allocation4 [shape = 's32[1]{0}', space=sflag, size = 0x4, scoped, tag = 'scoped memory for tpu_custom_call.1']
    #allocation5 [shape = 'u8[4096]{0}', space=vmem, size = 0x1000, scoped, tag = 'input window, operand 1, single buffered']
    #allocation6 [shape = 's32[1]{0}', space=sflag, size = 0x4, scoped, tag = 'scoped memory for tpu_custom_call.1']
    #allocation7 [shape = 'u8[512]{0}', space=vmem, size = 0x400, scoped, tag = 'input window, operand 5, single buffered']
    #allocation8 [shape = 'u8[12288]{0}', space=vmem, size = 0x3000, scoped, tag = 'input window, operand 6, single buffered']
    #allocation9 [shape = 's32[1]{0}', space=sflag, size = 0x4, scoped, tag = 'scoped memory for tpu_custom_call.1']
    #allocation10 [shape = 'u8[1024]{0}', space=vmem, size = 0x400, scoped, tag = 'input window, operand 9, single buffered']
    #allocation11 [shape = 'u8[4096]{0}', space=vmem, size = 0x1000, scoped, tag = 'output window, operand 0, single buffered']
    %17 = vsyncpa [#allocation3], 0
    %18 = vsyncpa [#allocation6], 0
    %19 = vsyncpa [#allocation9], 0
    %20 = vsyncpa [#allocation4], 0
    // Predicated region
    $region2: #{tpu_custom_call.1} parent=1 // pred_check
      _
    $region3: #{tpu_custom_call.1} parent=1 // pred_check_branch
      %22 = sbr.rel (0) target = $region5
    $region4: #{tpu_custom_call.1} parent=1 // pred_region
      %s24 = ssub.s32 128, 128
      %25 = vsyncadd [#allocation3], %s24
      %s27 = sshll.u32 [#allocation2], 4
      %s28 = int_to_ptr.vmem [resolvable:$true] %s27
      %30 = dma.hbm_to_vmem [thread:$0]  %s0, 128, %s28, [#allocation3]
    $region5: #{tpu_custom_call.1} parent=1 // pred_fallthru
      _
    // Predicated region
    $region6: #{tpu_custom_call.1} parent=1 // pred_check
      _
    $region7: #{tpu_custom_call.1} parent=1 // pred_check_branch
      %32 = sbr.rel (0) target = $region9
    $region8: #{tpu_custom_call.1} parent=1 // pred_region
      %s34 = ssub.s32 128, 128
      %35 = vsyncadd [#allocation6], %s34
      %s37 = sshll.u32 [#allocation5], 4
      %s38 = int_to_ptr.vmem [resolvable:$true] %s37
      %40 = dma.hbm_to_vmem [thread:$0]  %s1, 128, %s38, [#allocation6]
    $region9: #{tpu_custom_call.1} parent=1 // pred_fallthru
      _
    // Predicated region
    $region10: #{tpu_custom_call.1} parent=1 // pred_check
      _
    $region11: #{tpu_custom_call.1} parent=1 // pred_check_branch
      %42 = sbr.rel (0) target = $region13
    $region12: #{tpu_custom_call.1} parent=1 // pred_region
      _
    $region13: #{tpu_custom_call.1} parent=1 // pred_fallthru
      _
    // Predicated region
    $region14: #{tpu_custom_call.1} parent=1 // pred_check
      _
    $region15: #{tpu_custom_call.1} parent=1 // pred_check_branch
      %44 = sbr.rel (0) target = $region17
    $region16: #{tpu_custom_call.1} parent=1 // pred_region
      _
    $region17: #{tpu_custom_call.1} parent=1 // pred_fallthru
      _
    // Predicated region
    $region18: #{tpu_custom_call.1} parent=1 // pred_check
      _
    $region19: #{tpu_custom_call.1} parent=1 // pred_check_branch
      %46 = sbr.rel (0) target = $region21
    $region20: #{tpu_custom_call.1} parent=1 // pred_region
      _
    $region21: #{tpu_custom_call.1} parent=1 // pred_fallthru
      _
    // Predicated region
    $region22: #{tpu_custom_call.1} parent=1 // pred_check
      _
    $region23: #{tpu_custom_call.1} parent=1 // pred_check_branch
      %48 = sbr.rel (0) target = $region25
    $region24: #{tpu_custom_call.1} parent=1 // pred_region
      %s50 = ssub.s32 16, 16
      %51 = vsyncadd [#allocation6], %s50
      %s53 = sshll.u32 [#allocation7], 4
      %s54 = int_to_ptr.vmem [resolvable:$true] %s53
      %56 = dma.hbm_to_vmem [thread:$0]  %s5, 16, %s54, [#allocation6]
    $region25: #{tpu_custom_call.1} parent=1 // pred_fallthru
      _
    // Predicated region
    $region26: #{tpu_custom_call.1} parent=1 // pred_check
      _
    $region27: #{tpu_custom_call.1} parent=1 // pred_check_branch
      %58 = sbr.rel (0) target = $region29
    $region28: #{tpu_custom_call.1} parent=1 // pred_region
      %s60 = ssub.s32 384, 384
      %61 = vsyncadd [#allocation9], %s60
      %s62 = sshll.u32 [#allocation8], 4
      %s63 = int_to_ptr.vmem [resolvable:$true] %s62
      %68 = dma.hbm_to_vmem [thread:$0]  %s6, 384, %s63, [#allocation9], 128, 128, 8
    $region29: #{tpu_custom_call.1} parent=1 // pred_fallthru
      _
    // Predicated region
    $region30: #{tpu_custom_call.1} parent=1 // pred_check
      _
    $region31: #{tpu_custom_call.1} parent=1 // pred_check_branch
      %70 = sbr.rel (0) target = $region33
    $region32: #{tpu_custom_call.1} parent=1 // pred_region
      _
    $region33: #{tpu_custom_call.1} parent=1 // pred_fallthru
      _
    // Predicated region
    $region34: #{tpu_custom_call.1} parent=1 // pred_check
      _
    $region35: #{tpu_custom_call.1} parent=1 // pred_check_branch
      %72 = sbr.rel (0) target = $region37
    $region36: #{tpu_custom_call.1} parent=1 // pred_region
      _
    $region37: #{tpu_custom_call.1} parent=1 // pred_fallthru
      _
    // Predicated region
    $region38: #{tpu_custom_call.1} parent=1 // pred_check
      _
    $region39: #{tpu_custom_call.1} parent=1 // pred_check_branch
      %74 = sbr.rel (0) target = $region41
    $region40: #{tpu_custom_call.1} parent=1 // pred_region
      %s76 = ssub.s32 32, 32
      %77 = vsyncadd [#allocation9], %s76
      %s79 = sshll.u32 [#allocation10], 4
      %s80 = int_to_ptr.vmem [resolvable:$true] %s79
      %82 = dma.hbm_to_vmem [thread:$0]  %s9, 32, %s80, [#allocation9]
    $region41: #{tpu_custom_call.1} parent=1 // pred_fallthru
      _
    // Predicated region
    $region42: #{tpu_custom_call.1} parent=1 // pred_check
      _
    $region43: #{tpu_custom_call.1} parent=1 // pred_check_branch
      %84 = sbr.rel (0) target = $region45
    $region44: #{tpu_custom_call.1} parent=1 // pred_region
      _
    $region45: #{tpu_custom_call.1} parent=1 // pred_fallthru
      _
    // Predicated region
    $region46: #{tpu_custom_call.1} parent=1 // pred_check
      _
    $region47: #{tpu_custom_call.1} parent=1 // pred_check_branch
      %86 = sbr.rel (0) target = $region49
    $region48: #{tpu_custom_call.1} parent=1 // pred_region
      _
    $region49: #{tpu_custom_call.1} parent=1 // pred_fallthru
      _
    // Predicated region
    $region50: #{tpu_custom_call.1} parent=1 // pred_check
      _
    $region51: #{tpu_custom_call.1} parent=1 // pred_check_branch
      %88 = sbr.rel (0) target = $region53
    $region52: #{tpu_custom_call.1} parent=1 // pred_region
      %89 = dma.done [#allocation3], 128
    $region53: #{tpu_custom_call.1} parent=1 // pred_fallthru
      _
    // Predicated region
    $region54: #{tpu_custom_call.1} parent=1 // pred_check
      _
    $region55: #{tpu_custom_call.1} parent=1 // pred_check_branch
      %91 = sbr.rel (0) target = $region57
    $region56: #{tpu_custom_call.1} parent=1 // pred_region
      %92 = dma.done [#allocation6], 128
    $region57: #{tpu_custom_call.1} parent=1 // pred_fallthru
      _
    // Predicated region
    $region58: #{tpu_custom_call.1} parent=1 // pred_check
      _
    $region59: #{tpu_custom_call.1} parent=1 // pred_check_branch
      %94 = sbr.rel (0) target = $region61
    $region60: #{tpu_custom_call.1} parent=1 // pred_region
      %95 = dma.done [#allocation6], 16
    $region61: #{tpu_custom_call.1} parent=1 // pred_fallthru
      _
    // Predicated region
    $region62: #{tpu_custom_call.1} parent=1 // pred_check
      _
    $region63: #{tpu_custom_call.1} parent=1 // pred_check_branch
      %97 = sbr.rel (0) target = $region65
    $region64: #{tpu_custom_call.1} parent=1 // pred_region
      %98 = dma.done [#allocation9], 384
    $region65: #{tpu_custom_call.1} parent=1 // pred_fallthru
      _
    // Predicated region
    $region66: #{tpu_custom_call.1} parent=1 // pred_check
      _
    $region67: #{tpu_custom_call.1} parent=1 // pred_check_branch
      %100 = sbr.rel (0) target = $region69
    $region68: #{tpu_custom_call.1} parent=1 // pred_region
      %101 = dma.done [#allocation9], 32
    $region69: #{tpu_custom_call.1} parent=1 // pred_fallthru
      _
    %v102 = vld [vmem:[#allocation2] sm:$0xff]
    %v103 = vld [vmem:[%s2] sm:$0xff]
    %v104 = vld [vmem:[%s2 + $0x8] sm:$0xff]
    %v105 = vld [vmem:[%s2 + $0x10] sm:$0xff]
    %v106 = vld [vmem:[%s2 + $0x18] sm:$0xff]
    %v107 = vld [vmem:[%s2 + $0x20] sm:$0xff]
    %v108 = vld [vmem:[%s2 + $0x28] sm:$0xff]
    %v109 = vld [vmem:[%s2 + $0x30] sm:$0x3]
    %v110 = vld [vmem:[%s2 + $0x38] sm:$0x3]
    %v111 = vld [vmem:[%s3] sm:$0x3]
    %v113 = vlaneseq
    %v114 = vshrl.u32 %v113, 7
    %v115 = vsub.s32 0, %v114
    %v116 = vrot.slane %v111, %v115
    %v117 = vlaneseq
    %v118 = vshrl.u32 %v117, 7
    %v119 = vsub.s32 1, %v118
    %v120 = vrot.slane %v111, %v119
    %vm123 = vcmask 211968
    %v125 = vsel %vm123, %v102, 0
    %vm127 = vcmask 1041408
    %v129 = vsel %vm127, %v109, 0
    %v132 = vsel %vm127, %v110, 0
    %134 = vmatprep.subr.mxu0 %v104
    %135 = vmatpush1.msra.mxu0 %v103
    %136 = vmatprep.subr.mxu0 %v106
    %137 = vmatpush1.msra.mxu0 %v105
    %138 = vmatprep.subr.mxu0 %v108
    %139 = vmatpush1.msra.mxu0 %v107
    %140 = vmatprep.subr.mxu0 %v132
    %141 = vmatpush1.msra.mxu0 %v129
    %142 = vmatprep.subr.mxu0 0.0
    %143 = vmatpush1.msra.mxu0 0.0
    %144 = vmatprep.subr.mxu0 0.0
    %145 = vmatpush1.msra.mxu0 0.0
    %146 = vmatprep.subr.mxu0 0.0
    %147 = vmatpush1.msra.mxu0 0.0
    %148 = vmatprep.subr.mxu0 0.0
    %149 = vmatpush1.msra.mxu0 0.0
    %150 = vmatprep.subr.mxu0 0.0
    %151 = vmatpush1.msra.mxu0 0.0
    %152 = vmatprep.subr.mxu0 0.0
    %153 = vmatpush1.msra.mxu0 0.0
    %154 = vmatprep.subr.mxu0 0.0
    %155 = vmatpush1.msra.mxu0 0.0
    %156 = vmatprep.subr.mxu0 0.0
    %157 = vmatpush1.msra.mxu0 0.0
    %158 = vmatprep.subr.mxu0 0.0
    %159 = vmatpush1.msra.mxu0 0.0
    %160 = vmatprep.subr.mxu0 0.0
    %161 = vmatpush1.msra.mxu0 0.0
    %162 = vmatprep.subr.mxu0 0.0
    %163 = vmatpush1.msra.mxu0 0.0
    %164 = vmatprep.subr.mxu0 0.0
    %165 = vmatpush1.msra.mxu0 0.0
    %166 = vmatprep.subr.mxu0 0.0
    %167 = vmatpush1.msra.mxu0 0.0
    %168 = vmatprep.subr.mxu0 0.0
    %169 = vmatpush1.msra.mxu0 0.0
    %170 = vmatprep.subr.mxu0 0.0
    %171 = vmatpush1.msra.mxu0 0.0
    %172 = vmatprep.subr.mxu0 0.0
    %173 = vmatpush1.msra.mxu0 0.0
    %174 = vmatprep.subr.mxu0 0.0
    %175 = vmatpush1.msra.mxu0 0.0
    %176 = vmatprep.subr.mxu0 0.0
    %177 = vmatpush1.msra.mxu0 0.0
    %178 = vmatprep.subr.mxu0 0.0
    %179 = vmatpush1.msra.mxu0 0.0
    %180 = vmatprep.subr.mxu0 0.0
    %181 = vmatpush1.msra.mxu0 0.0
    %182 = vmatprep.subr.mxu0 0.0
    %183 = vmatpush1.msra.mxu0 0.0
    %184 = vmatprep.subr.mxu0 0.0
    %185 = vmatpush1.msra.mxu0 0.0
    %186 = vmatprep.subr.mxu0 0.0
    %187 = vmatpush1.msra.mxu0 0.0
    %188 = vmatprep.subr.mxu0 0.0
    %189 = vmatpush1.msra.mxu0 0.0
    %190 = vmatprep.subr.mxu0 0.0
    %191 = vmatpush1.msra.mxu0 0.0
    %192 = vmatprep.subr.mxu0 0.0
    %193 = vmatpush1.msra.mxu0 0.0
    %194 = vmatprep.subr.mxu0 0.0
    %195 = vmatpush1.msra.mxu0 0.0
    %196 = vmatprep.subr.mxu0 0.0
    %197 = vmatpush1.msra.mxu0 0.0
    %198 = vmatprep.mubr.f32.mxu0 0.0
    %199 = vmatmul.mubr.f32.gmra.mrb[0].mxu0 %v125
    %v200 = vpop.f32.mrb[0].mxu0
    %v201 = vadd.f32 %v116, %v200
    %v202 = vpop.f32.mrb[0].mxu0
    %v203 = vadd.f32 %v120, %v202
    %204 = vdwg.mxu0
    %v205 = vmax.f32 %v201, 0.0
    %v206 = vmax.f32 %v203, 0.0
    %v207 = vld [vmem:[%s4] sm:$0xff]
    %v208 = vld [vmem:[%s4 + $0x8] sm:$0xff]
    %v209 = vld [vmem:[%s4 + $0x10] sm:$0xff]
    %v210 = vld [vmem:[%s4 + $0x18] sm:$0xff]
    %v211 = vld [vmem:[%s4 + $0x20] sm:$0xff]
    %v212 = vld [vmem:[%s4 + $0x28] sm:$0xff]
    %v213 = vld [vmem:[%s4 + $0x30] sm:$0xff]
    %v214 = vld [vmem:[%s4 + $0x38] sm:$0xff]
    %v215 = vld [vmem:[%s4 + $0x40] sm:$0xff]
    %v216 = vld [vmem:[%s4 + $0x48] sm:$0xff]
    %v217 = vld [vmem:[%s4 + $0x50] sm:$0xff]
    %v218 = vld [vmem:[%s4 + $0x58] sm:$0xff]
    %v219 = vld [vmem:[%s4 + $0x60] sm:$0xff]
    %v220 = vld [vmem:[%s4 + $0x68] sm:$0xff]
    %v221 = vld [vmem:[%s4 + $0x70] sm:$0xff]
    %v222 = vld [vmem:[%s4 + $0x78] sm:$0xff]
    %v223 = vld [vmem:[%s4 + $0x80] sm:$0xff]
    %v224 = vld [vmem:[%s4 + $0x88] sm:$0xff]
    %v225 = vld [vmem:[%s4 + $0x90] sm:$0xff]
    %v226 = vld [vmem:[%s4 + $0x98] sm:$0xff]
    %v227 = vld [vmem:[#allocation7] sm:$0x1]
    %v229 = vlaneseq
    %v230 = vshrl.u32 %v229, 7
    %v231 = vsub.s32 0, %v230
    %v232 = vrot.slane %v227, %v231
    %vm234 = vcmask 261120
    %v236 = vsel %vm234, %v206, 0
    %238 = vmatprep.subr.mxu0 0.0
    %239 = vmatpush1.msra.mxu0 %v207
    %240 = vmatprep.subr.mxu0 0.0
    %241 = vmatpush1.msra.mxu0 %v208
    %242 = vmatprep.subr.mxu0 0.0
    %243 = vmatpush1.msra.mxu0 %v209
    %244 = vmatprep.subr.mxu0 0.0
    %245 = vmatpush1.msra.mxu0 %v210
    %246 = vmatprep.subr.mxu0 0.0
    %247 = vmatpush1.msra.mxu0 %v211
    %248 = vmatprep.subr.mxu0 0.0
    %249 = vmatpush1.msra.mxu0 %v212
    %250 = vmatprep.subr.mxu0 0.0
    %251 = vmatpush1.msra.mxu0 %v213
    %252 = vmatprep.subr.mxu0 0.0
    %253 = vmatpush1.msra.mxu0 %v214
    %254 = vmatprep.subr.mxu0 0.0
    %255 = vmatpush1.msra.mxu0 %v215
    %256 = vmatprep.subr.mxu0 0.0
    %257 = vmatpush1.msra.mxu0 %v216
    %258 = vmatprep.subr.mxu0 0.0
    %259 = vmatpush1.msra.mxu0 %v217
    %260 = vmatprep.subr.mxu0 0.0
    %261 = vmatpush1.msra.mxu0 %v218
    %262 = vmatprep.subr.mxu0 0.0
    %263 = vmatpush1.msra.mxu0 %v219
    %264 = vmatprep.subr.mxu0 0.0
    %265 = vmatpush1.msra.mxu0 %v220
    %266 = vmatprep.subr.mxu0 0.0
    %267 = vmatpush1.msra.mxu0 %v221
    %268 = vmatprep.subr.mxu0 0.0
    %269 = vmatpush1.msra.mxu0 %v222
    %270 = vmatprep.subr.mxu0 0.0
    %271 = vmatpush1.msra.mxu0 %v223
    %272 = vmatprep.subr.mxu0 0.0
    %273 = vmatpush1.msra.mxu0 %v224
    %274 = vmatprep.subr.mxu0 0.0
    %275 = vmatpush1.msra.mxu0 %v225
    %276 = vmatprep.subr.mxu0 0.0
    %277 = vmatpush1.msra.mxu0 %v226
    %278 = vmatprep.subr.mxu0 0.0
    %279 = vmatpush1.msra.mxu0 0.0
    %280 = vmatprep.subr.mxu0 0.0
    %281 = vmatpush1.msra.mxu0 0.0
    %282 = vmatprep.subr.mxu0 0.0
    %283 = vmatpush1.msra.mxu0 0.0
    %284 = vmatprep.subr.mxu0 0.0
    %285 = vmatpush1.msra.mxu0 0.0
    %286 = vmatprep.subr.mxu0 0.0
    %287 = vmatpush1.msra.mxu0 0.0
    %288 = vmatprep.subr.mxu0 0.0
    %289 = vmatpush1.msra.mxu0 0.0
    %290 = vmatprep.subr.mxu0 0.0
    %291 = vmatpush1.msra.mxu0 0.0
    %292 = vmatprep.subr.mxu0 0.0
    %293 = vmatpush1.msra.mxu0 0.0
    %294 = vmatprep.subr.mxu0 0.0
    %295 = vmatpush1.msra.mxu0 0.0
    %296 = vmatprep.subr.mxu0 0.0
    %297 = vmatpush1.msra.mxu0 0.0
    %298 = vmatprep.subr.mxu0 0.0
    %299 = vmatpush1.msra.mxu0 0.0
    %300 = vmatprep.subr.mxu0 0.0
    %301 = vmatpush1.msra.mxu0 0.0
    %302 = vmatprep.mubr.f32.mxu0 %v236
    %303 = vmatmul.mubr.f32.gmra.mrb[0].mxu0 %v205
    %v304 = vpop.f32.mrb[0].mxu0
    %v305 = vadd.f32 %v232, %v304
    %v306 = vpop.f32.mrb[0].mxu0
    %307 = vdwg.mxu0
    %vm308 = vcmask 195584
    %v309 = vsel %vm308, %v305, -inf
    %310 = vmax.xlane.f32.xlu0 %v309
    %v311 = vpop.xlane.xlu0 %310
    %v312 = vsub.f32 %v305, %v311
    %v313 = vmul.f32 %v312, 1.442695
    %v314 = vpow.pop %v313
    %v315 = vld [vmem:[#allocation8] sm:$0xff]
    %v316 = vld [vmem:[#allocation8 + $0x8] sm:$0xff]
    %v317 = vld [vmem:[#allocation8 + $0x10] sm:$0xff]
    %v319 = vsel %vm308, %v314, 0
    %321 = vmatprep.subr.mxu0 0.0
    %322 = vmatpush1.msra.mxu0 %v315
    %323 = vmatprep.subr.mxu0 0.0
    %324 = vmatpush1.msra.mxu0 %v316
    %325 = vmatprep.subr.mxu0 0.0
    %326 = vmatpush1.msra.mxu0 %v317
    %327 = vmatprep.subr.mxu0 0.0
    %328 = vmatpush1.msra.mxu0 0.0
    %329 = vmatprep.subr.mxu0 0.0
    %330 = vmatpush1.msra.mxu0 0.0
    %331 = vmatprep.subr.mxu0 0.0
    %332 = vmatpush1.msra.mxu0 0.0
    %333 = vmatprep.subr.mxu0 0.0
    %334 = vmatpush1.msra.mxu0 0.0
    %335 = vmatprep.subr.mxu0 0.0
    %336 = vmatpush1.msra.mxu0 0.0
    %337 = vmatprep.subr.mxu0 0.0
    %338 = vmatpush1.msra.mxu0 0.0
    %339 = vmatprep.subr.mxu0 0.0
    %340 = vmatpush1.msra.mxu0 0.0
    %341 = vmatprep.subr.mxu0 0.0
    %342 = vmatpush1.msra.mxu0 0.0
    %343 = vmatprep.subr.mxu0 0.0
    %344 = vmatpush1.msra.mxu0 0.0
    %345 = vmatprep.subr.mxu0 0.0
    %346 = vmatpush1.msra.mxu0 0.0
    %347 = vmatprep.subr.mxu0 0.0
    %348 = vmatpush1.msra.mxu0 0.0
    %349 = vmatprep.subr.mxu0 0.0
    %350 = vmatpush1.msra.mxu0 0.0
    %351 = vmatprep.subr.mxu0 0.0
    %352 = vmatpush1.msra.mxu0 0.0
    %353 = vmatprep.subr.mxu0 0.0
    %354 = vmatpush1.msra.mxu0 0.0
    %355 = vmatprep.subr.mxu0 0.0
    %356 = vmatpush1.msra.mxu0 0.0
    %357 = vmatprep.subr.mxu0 0.0
    %358 = vmatpush1.msra.mxu0 0.0
    %359 = vmatprep.subr.mxu0 0.0
    %360 = vmatpush1.msra.mxu0 0.0
    %361 = vmatprep.subr.mxu0 0.0
    %362 = vmatpush1.msra.mxu0 0.0
    %363 = vmatprep.subr.mxu0 0.0
    %364 = vmatpush1.msra.mxu0 0.0
    %365 = vmatprep.subr.mxu0 0.0
    %366 = vmatpush1.msra.mxu0 0.0
    %367 = vmatprep.subr.mxu0 0.0
    %368 = vmatpush1.msra.mxu0 0.0
    %369 = vmatprep.subr.mxu0 0.0
    %370 = vmatpush1.msra.mxu0 0.0
    %371 = vmatprep.subr.mxu0 0.0
    %372 = vmatpush1.msra.mxu0 0.0
    %373 = vmatprep.subr.mxu0 0.0
    %374 = vmatpush1.msra.mxu0 0.0
    %375 = vmatprep.subr.mxu0 0.0
    %376 = vmatpush1.msra.mxu0 0.0
    %377 = vmatprep.subr.mxu0 0.0
    %378 = vmatpush1.msra.mxu0 0.0
    %379 = vmatprep.subr.mxu0 0.0
    %380 = vmatpush1.msra.mxu0 0.0
    %381 = vmatprep.subr.mxu0 0.0
    %382 = vmatpush1.msra.mxu0 0.0
    %383 = vmatprep.subr.mxu0 0.0
    %384 = vmatpush1.msra.mxu0 0.0
    %385 = vmatprep.mubr.f32.mxu0 0.0
    %386 = vmatmul.mubr.f32.gmra.mrb[0].mxu0 %v319
    %v387 = vpop.f32.mrb[0].mxu0
    %v388 = vadd.f32 0.0, %v387
    %v389 = vpop.f32.mrb[0].mxu0
    %390 = vdwg.mxu0
    %v391 = vmax.f32 %v388, 1e-30
    %v392 = vrcp.pop %v391
    %v393 = vmul.f32 %v314, %v392
    %v394 = vld [vmem:[%s7] sm:$0xff]
    %v395 = vld [vmem:[%s7 + $0x8] sm:$0xff]
    %v396 = vld [vmem:[%s7 + $0x10] sm:$0xff]
    %v397 = vld [vmem:[%s7 + $0x18] sm:$0xff]
    %v398 = vld [vmem:[%s7 + $0x20] sm:$0xff]
    %v399 = vld [vmem:[%s7 + $0x28] sm:$0xff]
    %v401 = vsel %vm308, %v393, 0
    %403 = vmatprep.subr.mxu0 %v395
    %404 = vmatpush1.msra.mxu0 %v394
    %405 = vmatprep.subr.mxu0 %v397
    %406 = vmatpush1.msra.mxu0 %v396
    %407 = vmatprep.subr.mxu0 %v399
    %408 = vmatpush1.msra.mxu0 %v398
    %409 = vmatprep.subr.mxu0 0.0
    %410 = vmatpush1.msra.mxu0 0.0
    %411 = vmatprep.subr.mxu0 0.0
    %412 = vmatpush1.msra.mxu0 0.0
    %413 = vmatprep.subr.mxu0 0.0
    %414 = vmatpush1.msra.mxu0 0.0
    %415 = vmatprep.subr.mxu0 0.0
    %416 = vmatpush1.msra.mxu0 0.0
    %417 = vmatprep.subr.mxu0 0.0
    %418 = vmatpush1.msra.mxu0 0.0
    %419 = vmatprep.subr.mxu0 0.0
    %420 = vmatpush1.msra.mxu0 0.0
    %421 = vmatprep.subr.mxu0 0.0
    %422 = vmatpush1.msra.mxu0 0.0
    %423 = vmatprep.subr.mxu0 0.0
    %424 = vmatpush1.msra.mxu0 0.0
    %425 = vmatprep.subr.mxu0 0.0
    %426 = vmatpush1.msra.mxu0 0.0
    %427 = vmatprep.subr.mxu0 0.0
    %428 = vmatpush1.msra.mxu0 0.0
    %429 = vmatprep.subr.mxu0 0.0
    %430 = vmatpush1.msra.mxu0 0.0
    %431 = vmatprep.subr.mxu0 0.0
    %432 = vmatpush1.msra.mxu0 0.0
    %433 = vmatprep.subr.mxu0 0.0
    %434 = vmatpush1.msra.mxu0 0.0
    %435 = vmatprep.subr.mxu0 0.0
    %436 = vmatpush1.msra.mxu0 0.0
    %437 = vmatprep.subr.mxu0 0.0
    %438 = vmatpush1.msra.mxu0 0.0
    %439 = vmatprep.subr.mxu0 0.0
    %440 = vmatpush1.msra.mxu0 0.0
    %441 = vmatprep.subr.mxu0 0.0
    %442 = vmatpush1.msra.mxu0 0.0
    %443 = vmatprep.subr.mxu0 0.0
    %444 = vmatpush1.msra.mxu0 0.0
    %445 = vmatprep.subr.mxu0 0.0
    %446 = vmatpush1.msra.mxu0 0.0
    %447 = vmatprep.subr.mxu0 0.0
    %448 = vmatpush1.msra.mxu0 0.0
    %449 = vmatprep.subr.mxu0 0.0
    %450 = vmatpush1.msra.mxu0 0.0
    %451 = vmatprep.subr.mxu0 0.0
    %452 = vmatpush1.msra.mxu0 0.0
    %453 = vmatprep.subr.mxu0 0.0
    %454 = vmatpush1.msra.mxu0 0.0
    %455 = vmatprep.subr.mxu0 0.0
    %456 = vmatpush1.msra.mxu0 0.0
    %457 = vmatprep.subr.mxu0 0.0
    %458 = vmatpush1.msra.mxu0 0.0
    %459 = vmatprep.subr.mxu0 0.0
    %460 = vmatpush1.msra.mxu0 0.0
    %461 = vmatprep.subr.mxu0 0.0
    %462 = vmatpush1.msra.mxu0 0.0
    %463 = vmatprep.subr.mxu0 0.0
    %464 = vmatpush1.msra.mxu0 0.0
    %465 = vmatprep.subr.mxu0 0.0
    %466 = vmatpush1.msra.mxu0 0.0
    %467 = vmatprep.mubr.f32.mxu0 0.0
    %468 = vmatmul.mubr.f32.gmra.mrb[0].mxu0 %v401
    %v469 = vpop.f32.mrb[0].mxu0
    %v470 = vadd.f32 0.0, %v469
    %v471 = vpop.f32.mrb[0].mxu0
    %v472 = vadd.f32 0.0, %v471
    %473 = vdwg.mxu0
    %v474 = vld [vmem:[%s8] sm:$0xff]
    %v475 = vld [vmem:[%s8 + $0x8] sm:$0xff]
    %v476 = vld [vmem:[%s8 + $0x10] sm:$0xff]
    %v477 = vld [vmem:[%s8 + $0x18] sm:$0xff]
    %v478 = vld [vmem:[%s8 + $0x20] sm:$0xff]
    %v479 = vld [vmem:[%s8 + $0x28] sm:$0xff]
    %v480 = vld [vmem:[%s8 + $0x30] sm:$0xff]
    %v481 = vld [vmem:[%s8 + $0x38] sm:$0xff]
    %v482 = vld [vmem:[%s8 + $0x40] sm:$0xff]
    %v483 = vld [vmem:[%s8 + $0x48] sm:$0xff]
    %v484 = vld [vmem:[%s8 + $0x50] sm:$0xff]
    %v485 = vld [vmem:[%s8 + $0x58] sm:$0xff]
    %v486 = vld [vmem:[%s8 + $0x60] sm:$0xff]
    %v487 = vld [vmem:[%s8 + $0x68] sm:$0xff]
    %v488 = vld [vmem:[%s8 + $0x70] sm:$0xff]
    %v489 = vld [vmem:[%s8 + $0x78] sm:$0xff]
    %v490 = vld [vmem:[%s8 + $0x80] sm:$0xff]
    %v491 = vld [vmem:[%s8 + $0x88] sm:$0xff]
    %v492 = vld [vmem:[%s8 + $0x90] sm:$0xff]
    %v493 = vld [vmem:[%s8 + $0x98] sm:$0xff]
    %v494 = vld [vmem:[%s8 + $0xa0] sm:$0xff]
    %v495 = vld [vmem:[%s8 + $0xa8] sm:$0xff]
    %v496 = vld [vmem:[%s8 + $0xb0] sm:$0xff]
    %v497 = vld [vmem:[%s8 + $0xb8] sm:$0xff]
    %v498 = vld [vmem:[%s8 + $0xc0] sm:$0xff]
    %v499 = vld [vmem:[%s8 + $0xc8] sm:$0xff]
    %v500 = vld [vmem:[%s8 + $0xd0] sm:$0xff]
    %v501 = vld [vmem:[%s8 + $0xd8] sm:$0xff]
    %v502 = vld [vmem:[%s8 + $0xe0] sm:$0xff]
    %v503 = vld [vmem:[%s8 + $0xe8] sm:$0xff]
    %v504 = vld [vmem:[%s8 + $0xf0] sm:$0xff]
    %v505 = vld [vmem:[%s8 + $0xf8] sm:$0xff]
    %v506 = vld [vmem:[%s8 + $0x100] sm:$0xff]
    %v507 = vld [vmem:[%s8 + $0x108] sm:$0xff]
    %v508 = vld [vmem:[%s8 + $0x110] sm:$0xff]
    %v509 = vld [vmem:[%s8 + $0x118] sm:$0xff]
    %v510 = vld [vmem:[%s8 + $0x120] sm:$0xff]
    %v511 = vld [vmem:[%s8 + $0x128] sm:$0xff]
    %v512 = vld [vmem:[%s8 + $0x130] sm:$0xff]
    %v513 = vld [vmem:[%s8 + $0x138] sm:$0xff]
    %v514 = vld [vmem:[#allocation10] sm:$0x3]
    %v516 = vlaneseq
    %v517 = vshrl.u32 %v516, 7
    %v518 = vsub.s32 0, %v517
    %v519 = vrot.slane %v514, %v518
    %v520 = vlaneseq
    %v521 = vshrl.u32 %v520, 7
    %v522 = vsub.s32 1, %v521
    %v523 = vrot.slane %v514, %v522
    %526 = vmatprep.subr.mxu0 %v475
    %527 = vmatpush1.msra.mxu0 %v474
    %528 = vmatprep.subr.mxu0 %v477
    %529 = vmatpush1.msra.mxu0 %v476
    %530 = vmatprep.subr.mxu0 %v479
    %531 = vmatpush1.msra.mxu0 %v478
    %532 = vmatprep.subr.mxu0 %v481
    %533 = vmatpush1.msra.mxu0 %v480
    %534 = vmatprep.subr.mxu0 %v483
    %535 = vmatpush1.msra.mxu0 %v482
    %536 = vmatprep.subr.mxu0 %v485
    %537 = vmatpush1.msra.mxu0 %v484
    %538 = vmatprep.subr.mxu0 %v487
    %539 = vmatpush1.msra.mxu0 %v486
    %540 = vmatprep.subr.mxu0 %v489
    %541 = vmatpush1.msra.mxu0 %v488
    %542 = vmatprep.subr.mxu0 %v491
    %543 = vmatpush1.msra.mxu0 %v490
    %544 = vmatprep.subr.mxu0 %v493
    %545 = vmatpush1.msra.mxu0 %v492
    %546 = vmatprep.subr.mxu0 %v495
    %547 = vmatpush1.msra.mxu0 %v494
    %548 = vmatprep.subr.mxu0 %v497
    %549 = vmatpush1.msra.mxu0 %v496
    %550 = vmatprep.subr.mxu0 %v499
    %551 = vmatpush1.msra.mxu0 %v498
    %552 = vmatprep.subr.mxu0 %v501
    %553 = vmatpush1.msra.mxu0 %v500
    %554 = vmatprep.subr.mxu0 %v503
    %555 = vmatpush1.msra.mxu0 %v502
    %556 = vmatprep.subr.mxu0 %v505
    %557 = vmatpush1.msra.mxu0 %v504
    %558 = vmatprep.subr.mxu0 %v507
    %559 = vmatpush1.msra.mxu0 %v506
    %560 = vmatprep.subr.mxu0 %v509
    %561 = vmatpush1.msra.mxu0 %v508
    %562 = vmatprep.subr.mxu0 %v511
    %563 = vmatpush1.msra.mxu0 %v510
    %564 = vmatprep.subr.mxu0 %v513
    %565 = vmatpush1.msra.mxu0 %v512
    %566 = vmatprep.subr.mxu0 0.0
    %567 = vmatpush1.msra.mxu0 0.0
    %568 = vmatprep.subr.mxu0 0.0
    %569 = vmatpush1.msra.mxu0 0.0
    %570 = vmatprep.subr.mxu0 0.0
    %571 = vmatpush1.msra.mxu0 0.0
    %572 = vmatprep.subr.mxu0 0.0
    %573 = vmatpush1.msra.mxu0 0.0
    %574 = vmatprep.subr.mxu0 0.0
    %575 = vmatpush1.msra.mxu0 0.0
    %576 = vmatprep.subr.mxu0 0.0
    %577 = vmatpush1.msra.mxu0 0.0
    %578 = vmatprep.subr.mxu0 0.0
    %579 = vmatpush1.msra.mxu0 0.0
    %580 = vmatprep.subr.mxu0 0.0
    %581 = vmatpush1.msra.mxu0 0.0
    %582 = vmatprep.subr.mxu0 0.0
    %583 = vmatpush1.msra.mxu0 0.0
    %584 = vmatprep.subr.mxu0 0.0
    %585 = vmatpush1.msra.mxu0 0.0
    %586 = vmatprep.subr.mxu0 0.0
    %587 = vmatpush1.msra.mxu0 0.0
    %588 = vmatprep.subr.mxu0 0.0
    %589 = vmatpush1.msra.mxu0 0.0
    %590 = vmatprep.mubr.f32.mxu0 %v236
    %591 = vmatmul.mubr.f32.gmra.mrb[0].mxu0 %v205
    %v592 = vpop.f32.mrb[0].mxu0
    %v593 = vadd.f32 %v519, %v592
    %v594 = vpop.f32.mrb[0].mxu0
    %v595 = vadd.f32 %v523, %v594
    %596 = vdwg.mxu0
    %v597 = vmul.f32 %v470, %v593
    %v598 = vmul.f32 %v472, %v595
    %v599 = vld [vmem:[%s10] sm:$0xff]
    %v600 = vld [vmem:[%s10 + $0x8] sm:$0xff]
    %v601 = vld [vmem:[%s10 + $0x10] sm:$0xff]
    %v602 = vld [vmem:[%s10 + $0x18] sm:$0xff]
    %v603 = vld [vmem:[%s10 + $0x20] sm:$0xff]
    %v604 = vld [vmem:[%s10 + $0x28] sm:$0xff]
    %v605 = vld [vmem:[%s10 + $0x30] sm:$0xff]
    %v606 = vld [vmem:[%s10 + $0x38] sm:$0xff]
    %v607 = vld [vmem:[%s10 + $0x40] sm:$0xff]
    %v608 = vld [vmem:[%s10 + $0x48] sm:$0xff]
    %v609 = vld [vmem:[%s10 + $0x50] sm:$0xff]
    %v610 = vld [vmem:[%s10 + $0x58] sm:$0xff]
    %v611 = vld [vmem:[%s10 + $0x60] sm:$0xff]
    %v612 = vld [vmem:[%s10 + $0x68] sm:$0xff]
    %v613 = vld [vmem:[%s10 + $0x70] sm:$0xff]
    %v614 = vld [vmem:[%s10 + $0x78] sm:$0xff]
    %v615 = vld [vmem:[%s10 + $0x80] sm:$0xff]
    %v616 = vld [vmem:[%s10 + $0x88] sm:$0xff]
    %v617 = vld [vmem:[%s10 + $0x90] sm:$0xff]
    %v618 = vld [vmem:[%s10 + $0x98] sm:$0xff]
    %v619 = vld [vmem:[%s10 + $0xa0] sm:$0xff]
    %v620 = vld [vmem:[%s10 + $0xa8] sm:$0xff]
    %v621 = vld [vmem:[%s10 + $0xb0] sm:$0xff]
    %v622 = vld [vmem:[%s10 + $0xb8] sm:$0xff]
    %v623 = vld [vmem:[%s11] sm:$0x1]
    %v625 = vlaneseq
    %v626 = vshrl.u32 %v625, 7
    %v627 = vsub.s32 0, %v626
    %v628 = vrot.slane %v623, %v627
    %vm630 = vcmask 523264
    %v632 = vsel %vm630, %v598, 0
    %634 = vmatprep.subr.mxu0 0.0
    %635 = vmatpush1.msra.mxu0 %v599
    %636 = vmatprep.subr.mxu0 0.0
    %637 = vmatpush1.msra.mxu0 %v600
    %638 = vmatprep.subr.mxu0 0.0
    %639 = vmatpush1.msra.mxu0 %v601
    %640 = vmatprep.subr.mxu0 0.0
    %641 = vmatpush1.msra.mxu0 %v602
    %642 = vmatprep.subr.mxu0 0.0
    %643 = vmatpush1.msra.mxu0 %v603
    %644 = vmatprep.subr.mxu0 0.0
    %645 = vmatpush1.msra.mxu0 %v604
    %646 = vmatprep.subr.mxu0 0.0
    %647 = vmatpush1.msra.mxu0 %v605
    %648 = vmatprep.subr.mxu0 0.0
    %649 = vmatpush1.msra.mxu0 %v606
    %650 = vmatprep.subr.mxu0 0.0
    %651 = vmatpush1.msra.mxu0 %v607
    %652 = vmatprep.subr.mxu0 0.0
    %653 = vmatpush1.msra.mxu0 %v608
    %654 = vmatprep.subr.mxu0 0.0
    %655 = vmatpush1.msra.mxu0 %v609
    %656 = vmatprep.subr.mxu0 0.0
    %657 = vmatpush1.msra.mxu0 %v610
    %658 = vmatprep.subr.mxu0 0.0
    %659 = vmatpush1.msra.mxu0 %v611
    %660 = vmatprep.subr.mxu0 0.0
    %661 = vmatpush1.msra.mxu0 %v612
    %662 = vmatprep.subr.mxu0 0.0
    %663 = vmatpush1.msra.mxu0 %v613
    %664 = vmatprep.subr.mxu0 0.0
    %665 = vmatpush1.msra.mxu0 %v614
    %666 = vmatprep.subr.mxu0 0.0
    %667 = vmatpush1.msra.mxu0 %v615
    %668 = vmatprep.subr.mxu0 0.0
    %669 = vmatpush1.msra.mxu0 %v616
    %670 = vmatprep.subr.mxu0 0.0
    %671 = vmatpush1.msra.mxu0 %v617
    %672 = vmatprep.subr.mxu0 0.0
    %673 = vmatpush1.msra.mxu0 %v618
    %674 = vmatprep.subr.mxu0 0.0
    %675 = vmatpush1.msra.mxu0 %v619
    %676 = vmatprep.subr.mxu0 0.0
    %677 = vmatpush1.msra.mxu0 %v620
    %678 = vmatprep.subr.mxu0 0.0
    %679 = vmatpush1.msra.mxu0 %v621
    %680 = vmatprep.subr.mxu0 0.0
    %681 = vmatpush1.msra.mxu0 %v622
    %682 = vmatprep.subr.mxu0 0.0
    %683 = vmatpush1.msra.mxu0 0.0
    %684 = vmatprep.subr.mxu0 0.0
    %685 = vmatpush1.msra.mxu0 0.0
    %686 = vmatprep.subr.mxu0 0.0
    %687 = vmatpush1.msra.mxu0 0.0
    %688 = vmatprep.subr.mxu0 0.0
    %689 = vmatpush1.msra.mxu0 0.0
    %690 = vmatprep.subr.mxu0 0.0
    %691 = vmatpush1.msra.mxu0 0.0
    %692 = vmatprep.subr.mxu0 0.0
    %693 = vmatpush1.msra.mxu0 0.0
    %694 = vmatprep.subr.mxu0 0.0
    %695 = vmatpush1.msra.mxu0 0.0
    %696 = vmatprep.subr.mxu0 0.0
    %697 = vmatpush1.msra.mxu0 0.0
    %698 = vmatprep.mubr.f32.mxu0 %v632
    %699 = vmatmul.mubr.f32.gmra.mrb[0].mxu0 %v597
    %v700 = vpop.f32.mrb[0].mxu0
    %v701 = vadd.f32 %v628, %v700
    %v702 = vpop.f32.mrb[0].mxu0
    %703 = vdwg.mxu0
    %v704 = vld [vmem:[#allocation5] sm:$0xff]
    %v705 = vlog2.pop %v704
    %v706 = vmul.f32 %v705, 0.6931472
    %v707 = vsub.f32 0.0, %v706
    %v708 = vlog2.pop %v707
    %v709 = vmul.f32 %v708, 0.6931472
    %v710 = vsub.f32 %v701, %v709
    %vm711 = vcmask 39936
    %v712 = vsel %vm711, %v710, -inf
    %713 = vmax.xlane.f32.xlu0 %v712
    %v714 = vpop.xlane.xlu0 %713
    %v715 = vsub.f32 %v710, %v714
    %v716 = vmul.f32 %v715, 1.442695
    %v717 = vpow.pop %v716
    %v718 = vsel %vm711, %v717, 0.0
    %719 = vadd.xlane.f32.xlu0 %v718
    %v720 = vpop.xlane.xlu0 %719
    %v721 = vrcp.pop %v720
    %v722 = vmul.f32 %v717, %v721
    %723 = vst.msk [vmem:[#allocation11] sm:$0xff] %vm711, %v722
    // Predicated region
    $region70: #{tpu_custom_call.1} parent=1 // pred_check
      _
    $region71: #{tpu_custom_call.1} parent=1 // pred_check_branch
      %725 = sbr.rel (0) target = $region73
    $region72: #{tpu_custom_call.1} parent=1 // pred_region
      %s727 = ssub.s32 128, 128
      %728 = vsyncadd [#allocation4], %s727
      %s730 = sshll.u32 [#allocation11], 4
      %s731 = int_to_ptr.vmem [resolvable:$true] %s730
      %733 = dma.vmem_to_hbm [thread:$0]  %s731, 128, %s12, [#allocation4]
    $region73: #{tpu_custom_call.1} parent=1 // pred_fallthru
      _
    // Predicated region
    $region74: #{tpu_custom_call.1} parent=1 // pred_check
      _
    $region75: #{tpu_custom_call.1} parent=1 // pred_check_branch
      %735 = sbr.rel (0) target = $region77
    $region76: #{tpu_custom_call.1} parent=1 // pred_region
      %736 = dma.done [#allocation4], 128
    $region77: #{tpu_custom_call.1} parent=1 // pred_fallthru
      _
    %737 = vsyncpa [#allocation3], 1
    %738 = vsyncpa [#allocation6], 1
    %739 = vsyncpa [#allocation9], 1
    %740 = vsyncpa [#allocation4], 1

</llo_original>
